<compile_context>
chip_gen: v5e
topology: v5e:2x2
jax: 0.10.0
libtpu: 0.0.40
codegen_flags: <defaults>
</compile_context>

<pallas_src>
import functools

import jax
import jax.numpy as jnp
from jax.experimental import pallas as pl
from jax.experimental.pallas import tpu as pltpu

INPUT_FEATURES = 8
HIDDEN1 = 20
HIDDEN2 = 20
OUT_FEATURES = 2

# Cap keeps double-buffered x/out blocks plus (20, tb) f32 staging well under
# v5e's ~16 MiB scoped-VMEM default, so no vmem_limit_bytes override is needed
# on any generation (v5e 16 MiB / v6e 32 MiB / v7x 32 MiB scoped defaults).
_MAX_TILE_B = 32768
# Only force a >=2-tile grid (so both v7x TensorCores get work) when each tile
# would still be large enough to dwarf the ~0.35us per-step pipeline overhead.
_MIN_SPLIT_B = 2048


def _cdiv(a, b):
    return (a + b - 1) // b


def _round_up(n, m):
    return _cdiv(n, m) * m


def mlp_kernel(x_ref, w1_ref, b1_ref, w2_ref, b2_ref, w3_ref, b3_ref, o_ref,
               *, acts_dtype):
    # x_ref: (8, tb) with the batch on the 128-lane axis -> lane-dense everywhere.
    x = x_ref[...]

    # Layer 1: relu(W1 @ X + b1)   -> (20, tb), f32 accumulation.
    h1 = jnp.dot(w1_ref[...], x, preferred_element_type=jnp.float32)
    h1 = jnp.maximum(h1 + b1_ref[...], 0.0)

    # Layer 2: relu(W2 @ h1 + b2)  -> (20, tb). Re-cast activations to the MXU
    # feed dtype (bf16 on the default path) so v5e avoids the slow f32 matmul.
    h2 = jnp.dot(w2_ref[...], h1.astype(acts_dtype),
                 preferred_element_type=jnp.float32)
    h2 = jnp.maximum(h2 + b2_ref[...], 0.0)

    # Output layer: W3 @ h2 + b3   -> (2, tb), no activation.
    out = jnp.dot(w3_ref[...], h2.astype(acts_dtype),
                  preferred_element_type=jnp.float32)
    o_ref[...] = (out + b3_ref[...]).astype(o_ref.dtype)


@functools.partial(
    jax.jit,
    static_argnames=("tile_b", "use_bf16_inputs", "feature_major_in",
                     "feature_major_out"))
def ann_model_forward(x, params, *, tile_b=16384, use_bf16_inputs=True,
                      feature_major_in=False, feature_major_out=False):
    """Forward pass matching nn.Linear semantics: y = x @ W^T + b per layer.

    x: (B, 8) f32 by default, or (8, B) if feature_major_in=True.
    params: dict w1,b1,w2,b2,w3,b3; W in PyTorch (out, in) layout, b in (out, 1).
    Returns (B, 2) f32, or (2, B) if feature_major_out=True.
    """
    B = x.shape[1] if feature_major_in else x.shape[0]

    # ---- tile selection: amortize per-step overhead, bound padding, and keep
    # >= 2 tiles for v7x megacore on medium/large batches. -------------------
    tile_b = min(max(int(tile_b), 128), _MAX_TILE_B)
    n_tiles = max(1, _cdiv(B, tile_b))
    if n_tiles == 1 and B >= 2 * _MIN_SPLIT_B:
        n_tiles = 2
    tb = _round_up(_cdiv(B, n_tiles), 128)
    n_tiles = _cdiv(B, tb)
    Bp = n_tiles * tb

    # ---- layout + dtype prep (XLA fuses transpose/cast/pad into one pass). --
    in_dt = jnp.bfloat16 if use_bf16_inputs else jnp.float32
    x_t = x if feature_major_in else jnp.transpose(x)          # (8, B)
    x_t = x_t.astype(in_dt)
    if Bp != B:
        x_t = jnp.pad(x_t, ((0, 0), (0, Bp - B)))

    w1 = params["w1"].astype(in_dt)
    w2 = params["w2"].astype(in_dt)
    w3 = params["w3"].astype(in_dt)
    # Biases stay f32: added post-accumulation, so no precision loss and tiny.
    b1 = params["b1"].astype(jnp.float32)
    b2 = params["b2"].astype(jnp.float32)
    b3 = params["b3"].astype(jnp.float32)

    flops = 2 * Bp * (INPUT_FEATURES * HIDDEN1 + HIDDEN1 * HIDDEN2
                      + HIDDEN2 * OUT_FEATURES)
    in_bytes = x_t.size * x_t.dtype.itemsize
    w_bytes = sum(a.size * a.dtype.itemsize for a in (w1, b1, w2, b2, w3, b3))
    out_bytes = Bp * OUT_FEATURES * 4
    cost = pl.CostEstimate(flops=flops, transcendentals=0,
                           bytes_accessed=in_bytes + w_bytes + out_bytes)

    # Constant index_map -> weights/biases stay VMEM-resident across grid steps
    # (no re-DMA); not worth shaving their second pipeline buffer (~few KB).
    resident = lambda a: pl.BlockSpec(a.shape, lambda i: (0, 0))

    out_t = pl.pallas_call(
        functools.partial(mlp_kernel, acts_dtype=in_dt),
        out_shape=jax.ShapeDtypeStruct((OUT_FEATURES, Bp), jnp.float32),
        grid=(n_tiles,),
        in_specs=[
            pl.BlockSpec((INPUT_FEATURES, tb), lambda i: (0, i)),   # x tile
            resident(w1), resident(b1),
            resident(w2), resident(b2),
            resident(w3), resident(b3),
        ],
        out_specs=pl.BlockSpec((OUT_FEATURES, tb), lambda i: (0, i)),
        compiler_params=pltpu.CompilerParams(
            dimension_semantics=("parallel",)),
        cost_estimate=cost,
    )(x_t, w1, b1, w2, b2, w3, b3)

    out_t = out_t[:, :B]                                         # (2, B)
    if feature_major_out:
        return out_t
    return jnp.transpose(out_t)                                  # (B, 2)


def init_params(key):
    """Deterministic init mimicking nn.Linear: W in (out, in), b in (out, 1)."""
    k1, k2, k3, k4, k5, k6 = jax.random.split(key, 6)

    def uniform(k, shape, fan_in):
        bound = 1.0 / jnp.sqrt(fan_in)
        return jax.random.uniform(k, shape, jnp.float32, -bound, bound)

    return {
        "w1": uniform(k1, (HIDDEN1, INPUT_FEATURES), INPUT_FEATURES),
        "b1": uniform(k2, (HIDDEN1, 1), INPUT_FEATURES),
        "w2": uniform(k3, (HIDDEN2, HIDDEN1), HIDDEN1),
        "b2": uniform(k4, (HIDDEN2, 1), HIDDEN1),
        "w3": uniform(k5, (OUT_FEATURES, HIDDEN2), HIDDEN2),
        "b3": uniform(k6, (OUT_FEATURES, 1), HIDDEN2),
    }


def reference_forward(x, params):
    """Pure-JAX reference matching PyTorch: y = x @ W^T + b."""
    h1 = jnp.maximum(x @ params["w1"].T + params["b1"].T, 0.0)
    h2 = jnp.maximum(h1 @ params["w2"].T + params["b2"].T, 0.0)
    return h2 @ params["w3"].T + params["b3"].T


if __name__ == "__main__":
    key = jax.random.PRNGKey(0)
    kx, kx2, kp = jax.random.split(key, 3)
    params = init_params(kp)

    # --- small batch, exact f32 path (single tile, padded to 128 lanes) -----
    batch = 8
    x = jax.random.normal(kx, (batch, INPUT_FEATURES), jnp.float32)
    ref = reference_forward(x, params)

    out_f32 = jax.block_until_ready(
        ann_model_forward(x, params, use_bf16_inputs=False))
    assert out_f32.shape == (batch, OUT_FEATURES)
    assert jnp.allclose(out_f32, ref, atol=1e-5, rtol=1e-5)

    # --- default bf16-input path (f32 accumulation; quantization-level error)
    out_bf16 = jax.block_until_ready(ann_model_forward(x, params))
    assert out_bf16.shape == (batch, OUT_FEATURES)
    assert jnp.allclose(out_bf16, ref, atol=5e-2, rtol=5e-2)

    # --- non-multiple-of-tile batch: multi-tile grid + padding path ---------
    batch2 = 300
    x2 = jax.random.normal(kx2, (batch2, INPUT_FEATURES), jnp.float32)
    ref2 = reference_forward(x2, params)
    out2 = jax.block_until_ready(
        ann_model_forward(x2, params, tile_b=128, use_bf16_inputs=False))
    assert out2.shape == (batch2, OUT_FEATURES)
    assert jnp.allclose(out2, ref2, atol=1e-5, rtol=1e-5)

    # --- feature-major in/out: skips both wrapper transpose passes ----------
    out3 = jax.block_until_ready(
        ann_model_forward(jnp.transpose(x2), params, tile_b=128,
                          use_bf16_inputs=False,
                          feature_major_in=True, feature_major_out=True))
    assert out3.shape == (OUT_FEATURES, batch2)
    assert jnp.allclose(jnp.transpose(out3), ref2, atol=1e-5, rtol=1e-5)

    print("KERNEL_OK")
</pallas_src>

<mosaic_0001>
module attributes {stable_mosaic.version = 11 : i64} {
  func.func @mlp_kernel(%arg0: i32, %arg1: memref<8x128xf32, #tpu.memory_space<vmem>>, %arg2: memref<20x8xf32, #tpu.memory_space<vmem>>, %arg3: memref<20x1xf32, #tpu.memory_space<vmem>>, %arg4: memref<20x20xf32, #tpu.memory_space<vmem>>, %arg5: memref<20x1xf32, #tpu.memory_space<vmem>>, %arg6: memref<2x20xf32, #tpu.memory_space<vmem>>, %arg7: memref<2x1xf32, #tpu.memory_space<vmem>>, %arg8: memref<2x128xf32, #tpu.memory_space<vmem>>) attributes {dimension_semantics = [#tpu.dimension_semantics<parallel>], iteration_bounds = array<i64: 1>, scalar_prefetch = 0 : i64, scratch_operands = 0 : i64, tpu.core_type = #tpu.core_type<tc>, window_params = [{transform_indices = @transform_0, window_bounds = array<i64: 8, 128>}, {pipeline_mode = #tpu.pipeline_mode<synchronous>, transform_indices = @transform_1, window_bounds = array<i64: 20, 8>}, {pipeline_mode = #tpu.pipeline_mode<synchronous>, transform_indices = @transform_2, window_bounds = array<i64: 20, 1>}, {pipeline_mode = #tpu.pipeline_mode<synchronous>, transform_indices = @transform_3, window_bounds = array<i64: 20, 20>}, {pipeline_mode = #tpu.pipeline_mode<synchronous>, transform_indices = @transform_4, window_bounds = array<i64: 20, 1>}, {pipeline_mode = #tpu.pipeline_mode<synchronous>, transform_indices = @transform_5, window_bounds = array<i64: 2, 20>}, {pipeline_mode = #tpu.pipeline_mode<synchronous>, transform_indices = @transform_6, window_bounds = array<i64: 2, 1>}, {transform_indices = @transform_7, window_bounds = array<i64: 2, 128>}]} {
    %c0 = arith.constant 0 : index
    %c0_0 = arith.constant 0 : index
    %0 = vector.load %arg1[%c0, %c0_0] : memref<8x128xf32, #tpu.memory_space<vmem>>, vector<8x128xf32>
    %c0_1 = arith.constant 0 : index
    %c0_2 = arith.constant 0 : index
    %1 = vector.load %arg2[%c0_1, %c0_2] : memref<20x8xf32, #tpu.memory_space<vmem>>, vector<20x8xf32>
    %cst = arith.constant dense<0.000000e+00> : vector<20x128xf32>
    %2 = tpu.matmul %1, %0, %cst {dimension_numbers = #tpu.dot_dimension_numbers<[1], [0], [0], [1], [0, 0, 1, 1], [], []>} : vector<20x8xf32>, vector<8x128xf32>, vector<20x128xf32> -> vector<20x128xf32>
    %c0_3 = arith.constant 0 : index
    %c0_4 = arith.constant 0 : index
    %3 = vector.load %arg3[%c0_3, %c0_4] : memref<20x1xf32, #tpu.memory_space<vmem>>, vector<20x1xf32>
    %4 = vector.broadcast %3 : vector<20x1xf32> to vector<20x128xf32>
    %5 = arith.addf %2, %4 : vector<20x128xf32>
    %cst_5 = arith.constant 0.000000e+00 : f32
    %6 = vector.broadcast %cst_5 : f32 to vector<20x128xf32>
    %7 = arith.maximumf %5, %6 : vector<20x128xf32>
    %c0_6 = arith.constant 0 : index
    %c0_7 = arith.constant 0 : index
    %8 = vector.load %arg4[%c0_6, %c0_7] : memref<20x20xf32, #tpu.memory_space<vmem>>, vector<20x20xf32>
    %cst_8 = arith.constant dense<0.000000e+00> : vector<20x128xf32>
    %9 = tpu.matmul %8, %7, %cst_8 {dimension_numbers = #tpu.dot_dimension_numbers<[1], [0], [0], [1], [0, 0, 1, 1], [], []>} : vector<20x20xf32>, vector<20x128xf32>, vector<20x128xf32> -> vector<20x128xf32>
    %c0_9 = arith.constant 0 : index
    %c0_10 = arith.constant 0 : index
    %10 = vector.load %arg5[%c0_9, %c0_10] : memref<20x1xf32, #tpu.memory_space<vmem>>, vector<20x1xf32>
    %11 = vector.broadcast %10 : vector<20x1xf32> to vector<20x128xf32>
    %12 = arith.addf %9, %11 : vector<20x128xf32>
    %cst_11 = arith.constant 0.000000e+00 : f32
    %13 = vector.broadcast %cst_11 : f32 to vector<20x128xf32>
    %14 = arith.maximumf %12, %13 : vector<20x128xf32>
    %c0_12 = arith.constant 0 : index
    %c0_13 = arith.constant 0 : index
    %15 = vector.load %arg6[%c0_12, %c0_13] : memref<2x20xf32, #tpu.memory_space<vmem>>, vector<2x20xf32>
    %cst_14 = arith.constant dense<0.000000e+00> : vector<2x128xf32>
    %16 = tpu.matmul %15, %14, %cst_14 {dimension_numbers = #tpu.dot_dimension_numbers<[1], [0], [0], [1], [0, 0, 1, 1], [], []>} : vector<2x20xf32>, vector<20x128xf32>, vector<2x128xf32> -> vector<2x128xf32>
    %c0_15 = arith.constant 0 : index
    %c0_16 = arith.constant 0 : index
    %17 = vector.load %arg7[%c0_15, %c0_16] : memref<2x1xf32, #tpu.memory_space<vmem>>, vector<2x1xf32>
    %18 = vector.broadcast %17 : vector<2x1xf32> to vector<2x128xf32>
    %19 = arith.addf %16, %18 : vector<2x128xf32>
    %c0_17 = arith.constant 0 : index
    %c0_18 = arith.constant 0 : index
    %20 = vector.load %arg8[%c0_17, %c0_18] : memref<2x128xf32, #tpu.memory_space<vmem>>, vector<2x128xf32>
    tpu.vector_store %arg8[%c0_17, %c0_18], %19 {strides = array<i32>} : memref<2x128xf32, #tpu.memory_space<vmem>>, vector<2x128xf32>,
    return
  }
  func.func @transform_0(%arg0: i32) -> (i32, i32) {
    %c0_i32 = arith.constant 0 : i32
    %c0_i32_0 = arith.constant 0 : i32
    return %c0_i32, %arg0 : i32, i32
  }
  func.func @transform_1(%arg0: i32) -> (i32, i32) {
    %c0_i32 = arith.constant 0 : i32
    %c0_i32_0 = arith.constant 0 : i32
    %c0_i32_1 = arith.constant 0 : i32
    return %c0_i32, %c0_i32_0 : i32, i32
  }
  func.func @transform_2(%arg0: i32) -> (i32, i32) {
    %c0_i32 = arith.constant 0 : i32
    %c0_i32_0 = arith.constant 0 : i32
    %c0_i32_1 = arith.constant 0 : i32
    return %c0_i32, %c0_i32_0 : i32, i32
  }
  func.func @transform_3(%arg0: i32) -> (i32, i32) {
    %c0_i32 = arith.constant 0 : i32
    %c0_i32_0 = arith.constant 0 : i32
    %c0_i32_1 = arith.constant 0 : i32
    return %c0_i32, %c0_i32_0 : i32, i32
  }
  func.func @transform_4(%arg0: i32) -> (i32, i32) {
    %c0_i32 = arith.constant 0 : i32
    %c0_i32_0 = arith.constant 0 : i32
    %c0_i32_1 = arith.constant 0 : i32
    return %c0_i32, %c0_i32_0 : i32, i32
  }
  func.func @transform_5(%arg0: i32) -> (i32, i32) {
    %c0_i32 = arith.constant 0 : i32
    %c0_i32_0 = arith.constant 0 : i32
    %c0_i32_1 = arith.constant 0 : i32
    return %c0_i32, %c0_i32_0 : i32, i32
  }
  func.func @transform_6(%arg0: i32) -> (i32, i32) {
    %c0_i32 = arith.constant 0 : i32
    %c0_i32_0 = arith.constant 0 : i32
    %c0_i32_1 = arith.constant 0 : i32
    return %c0_i32, %c0_i32_0 : i32, i32
  }
  func.func @transform_7(%arg0: i32) -> (i32, i32) {
    %c0_i32 = arith.constant 0 : i32
    %c0_i32_0 = arith.constant 0 : i32
    return %c0_i32, %arg0 : i32, i32
  }
}

</mosaic_0001>

<llo_original>
// kernel: ann_model_forward.1
$region0: #{ann_model_forward.1}
  #allocation0 [shape = 'u32[]', space=smem, size = 0x4, offset = 0x4, fixed_abs, tag = 'smem constant byte address 0x4 - core index']
  #allocation1 [shape = 'u32[72,128]{1,0:T(1,128)}', space=vmem, size = 0x9000, scoped, tag = 'internal scratch']
  %s0 = inlined_call_operand.vmem [shape: f32[8,128], index: 0, kind: input, shape index: {}]
  %s1 = inlined_call_operand.vmem [shape: f32[20,8], index: 1, kind: input, shape index: {}]
  %s2 = inlined_call_operand.vmem [shape: f32[20,1], index: 2, kind: input, shape index: {}]
  %s3 = inlined_call_operand.vmem [shape: f32[20,20], index: 3, kind: input, shape index: {}]
  %s4 = inlined_call_operand.vmem [shape: f32[20,1], index: 4, kind: input, shape index: {}]
  %s5 = inlined_call_operand.vmem [shape: f32[2,20], index: 5, kind: input, shape index: {}]
  %s6 = inlined_call_operand.vmem [shape: f32[2,1], index: 6, kind: input, shape index: {}]
  %s7 = inlined_call_operand.vmem [shape: f32[2,128], index: 7, kind: output, shape index: {}]
  %s8 = sld [smem:[#allocation0]]
  $region38: #{ann_model_forward.1} parent=0
    _
  %s10 = ssub.s32 1, %s8
  %s11 = scalar_select 0, %s10, %s8
  // Predicated region
  $region2: #{ann_model_forward.1} parent=0 // pred_check
    _
  $region3: #{ann_model_forward.1} parent=0 // pred_check_branch
    %13 = sbr.rel (0) target = $region5
  $region4: #{ann_model_forward.1} parent=0 // pred_region
    _
  $region5: #{ann_model_forward.1} parent=0 // pred_fallthru
    _
  // Predicated region
  $region6: #{ann_model_forward.1} parent=0 // pred_check
    _
  $region7: #{ann_model_forward.1} parent=0 // pred_check_branch
    %15 = sbr.rel (0) target = $region9
  $region8: #{ann_model_forward.1} parent=0 // pred_region
    _
  $region9: #{ann_model_forward.1} parent=0 // pred_fallthru
    _
  // Predicated region
  $region10: #{ann_model_forward.1} parent=0 // pred_check
    _
  $region11: #{ann_model_forward.1} parent=0 // pred_check_branch
    %17 = sbr.rel (0) target = $region13
  $region12: #{ann_model_forward.1} parent=0 // pred_region
    _
  $region13: #{ann_model_forward.1} parent=0 // pred_fallthru
    _
  // Predicated region
  $region14: #{ann_model_forward.1} parent=0 // pred_check
    _
  $region15: #{ann_model_forward.1} parent=0 // pred_check_branch
    %19 = sbr.rel (0) target = $region17
  $region16: #{ann_model_forward.1} parent=0 // pred_region
    _
  $region17: #{ann_model_forward.1} parent=0 // pred_fallthru
    _
  // Predicated region
  $region18: #{ann_model_forward.1} parent=0 // pred_check
    _
  $region19: #{ann_model_forward.1} parent=0 // pred_check_branch
    %21 = sbr.rel (0) target = $region21
  $region20: #{ann_model_forward.1} parent=0 // pred_region
    _
  $region21: #{ann_model_forward.1} parent=0 // pred_fallthru
    _
  // Predicated region
  $region22: #{ann_model_forward.1} parent=0 // pred_check
    _
  $region23: #{ann_model_forward.1} parent=0 // pred_check_branch
    %23 = sbr.rel (0) target = $region25
  $region24: #{ann_model_forward.1} parent=0 // pred_region
    _
  $region25: #{ann_model_forward.1} parent=0 // pred_fallthru
    _
  // Predicated region
  $region26: #{ann_model_forward.1} parent=0 // pred_check
    _
  $region27: #{ann_model_forward.1} parent=0 // pred_check_branch
    %25 = sbr.rel (0) target = $region29
  $region28: #{ann_model_forward.1} parent=0 // pred_region
    _
  $region29: #{ann_model_forward.1} parent=0 // pred_fallthru
    _
  %v26 = vld [vmem:[%s0] sm:$0xff]
  %v27 = vld [vmem:[%s1] sm:$0xff]
  %v28 = vld [vmem:[%s1 + $0x8] sm:$0xff]
  %v29 = vld [vmem:[%s1 + $0x10] sm:$0xf]
  %v30 = vld [vmem:[%s2] sm:$0xff]
  %v31 = vld [vmem:[%s2 + $0x8] sm:$0xff]
  %v32 = vld [vmem:[%s2 + $0x10] sm:$0xf]
  %34 = vset.pattern.permute.xlu0 0
  %35 = vperm.xlu0 %34, %v30
  %v36 = vpop.permute.xlu0 %35
  %39 = vset.pattern.permute.xlu0 0
  %40 = vperm.xlu0 %39, %v31
  %v41 = vpop.permute.xlu0 %40
  %44 = vset.pattern.permute.xlu0 0
  %45 = vperm.xlu0 %44, %v32
  %v46 = vpop.permute.xlu0 %45
  %vm48 = vcmask 64512
  %v50 = vsel %vm48, %v27, 0
  %v53 = vsel %vm48, %v28, 0
  %v56 = vsel %vm48, %v29, 0
  %58 = vmatpush.msra.mxu0 0.0
  %59 = vmatpush.msra.mxu0 0.0
  %60 = vmatpush.msra.mxu0 0.0
  %61 = vmatpush.msra.mxu0 0.0
  %62 = vmatpush.msra.mxu0 0.0
  %63 = vmatpush.msra.mxu0 0.0
  %64 = vmatpush.msra.mxu0 0.0
  %65 = vmatpush.msra.mxu0 0.0
  %66 = vmatpush.msra.mxu0 0.0
  %67 = vmatpush.msra.mxu0 0.0
  %68 = vmatpush.msra.mxu0 0.0
  %69 = vmatpush.msra.mxu0 0.0
  %70 = vmatpush.msra.mxu0 0.0
  %71 = vmatpush.msra.mxu0 0.0
  %72 = vmatpush.msra.mxu0 0.0
  %73 = vmatpush.msra.mxu0 %v26
  %74 = vmatmul.f32.gmra.mxu0 %v50
  %v75 = vpop.f32.mrf.mxu0
  %v76 = vadd.f32 %v36, %v75
  %77 = vmatmul.f32.gmra.mxu0 %v53
  %v78 = vpop.f32.mrf.mxu0
  %v79 = vadd.f32 %v41, %v78
  %80 = vmatmul.f32.gmra.mxu0 %v56
  %v81 = vpop.f32.mrf.mxu0
  %v82 = vadd.f32 %v46, %v81
  %83 = vdwg.mxu0
  %v84 = vmax.f32 %v76, 0.0
  %v85 = vmax.f32 %v79, 0.0
  %v86 = vmax.f32 %v82, 0.0
  %v87 = vld [vmem:[%s3] sm:$0xff]
  %v88 = vld [vmem:[%s3 + $0x8] sm:$0xff]
  %v89 = vld [vmem:[%s3 + $0x10] sm:$0xf]
  %v90 = vld [vmem:[%s4] sm:$0xff]
  %v91 = vld [vmem:[%s4 + $0x8] sm:$0xff]
  %v92 = vld [vmem:[%s4 + $0x10] sm:$0xf]
  %94 = vset.pattern.permute.xlu0 0
  %95 = vperm.xlu0 %94, %v90
  %v96 = vpop.permute.xlu0 %95
  %99 = vset.pattern.permute.xlu0 0
  %100 = vperm.xlu0 %99, %v91
  %v101 = vpop.permute.xlu0 %100
  %104 = vset.pattern.permute.xlu0 0
  %105 = vperm.xlu0 %104, %v92
  %v106 = vpop.permute.xlu0 %105
  %vm108 = vcmask 162816
  %v110 = vsel %vm108, %v87, 0
  %v113 = vsel %vm108, %v88, 0
  %v116 = vsel %vm108, %v89, 0
  %vm118 = vcmask 1043456
  %v120 = vsel %vm118, %v86, 0
  %122 = vmatpush.msra.mxu0 0.0
  %123 = vmatpush.msra.mxu0 0.0
  %124 = vmatpush.msra.mxu0 0.0
  %125 = vmatpush.msra.mxu0 0.0
  %126 = vmatpush.msra.mxu0 0.0
  %127 = vmatpush.msra.mxu0 0.0
  %128 = vmatpush.msra.mxu0 0.0
  %129 = vmatpush.msra.mxu0 0.0
  %130 = vmatpush.msra.mxu0 0.0
  %131 = vmatpush.msra.mxu0 0.0
  %132 = vmatpush.msra.mxu0 0.0
  %133 = vmatpush.msra.mxu0 0.0
  %134 = vmatpush.msra.mxu0 0.0
  %135 = vmatpush.msra.mxu0 %v120
  %136 = vmatpush.msra.mxu0 %v85
  %137 = vmatpush.msra.mxu0 %v84
  %138 = vmatmul.f32.gmra.mxu0 %v110
  %v139 = vpop.f32.mrf.mxu0
  %v140 = vadd.f32 %v96, %v139
  %141 = vmatmul.f32.gmra.mxu0 %v113
  %v142 = vpop.f32.mrf.mxu0
  %v143 = vadd.f32 %v101, %v142
  %144 = vmatmul.f32.gmra.mxu0 %v116
  %v145 = vpop.f32.mrf.mxu0
  %v146 = vadd.f32 %v106, %v145
  %147 = vdwg.mxu0
  %v148 = vmax.f32 %v140, 0.0
  %v149 = vmax.f32 %v143, 0.0
  %v150 = vmax.f32 %v146, 0.0
  %v151 = vld [vmem:[%s5] sm:$0x3]
  %v152 = vld [vmem:[%s6] sm:$0x3]
  %154 = vset.pattern.permute.xlu0 0
  %155 = vperm.xlu0 %154, %v152
  %v156 = vpop.permute.xlu0 %155
  %v159 = vsel %vm108, %v151, 0
  %v162 = vsel %vm118, %v150, 0
  %164 = vmatpush.msra.mxu0 0.0
  %165 = vmatpush.msra.mxu0 0.0
  %166 = vmatpush.msra.mxu0 0.0
  %167 = vmatpush.msra.mxu0 0.0
  %168 = vmatpush.msra.mxu0 0.0
  %169 = vmatpush.msra.mxu0 0.0
  %170 = vmatpush.msra.mxu0 0.0
  %171 = vmatpush.msra.mxu0 0.0
  %172 = vmatpush.msra.mxu0 0.0
  %173 = vmatpush.msra.mxu0 0.0
  %174 = vmatpush.msra.mxu0 0.0
  %175 = vmatpush.msra.mxu0 0.0
  %176 = vmatpush.msra.mxu0 0.0
  %177 = vmatpush.msra.mxu0 %v162
  %178 = vmatpush.msra.mxu0 %v149
  %179 = vmatpush.msra.mxu0 %v148
  %180 = vmatmul.f32.gmra.mxu0 %v159
  %v181 = vpop.f32.mrf.mxu0
  %v182 = vadd.f32 %v156, %v181
  %183 = vdwg.mxu0
  %184 = vst [vmem:[%s7] sm:$0x3] %v182
  // Predicated region
  $region30: #{ann_model_forward.1} parent=0 // pred_check
    _
  $region31: #{ann_model_forward.1} parent=0 // pred_check_branch
    %186 = sbr.rel (0) target = $region33
  $region32: #{ann_model_forward.1} parent=0 // pred_region
    _
  $region33: #{ann_model_forward.1} parent=0 // pred_fallthru
    _
  // Predicated region
  $region34: #{ann_model_forward.1} parent=0 // pred_check
    _
  $region35: #{ann_model_forward.1} parent=0 // pred_check_branch
    %188 = sbr.rel (0) target = $region37
  $region36: #{ann_model_forward.1} parent=0 // pred_region
    _
  $region37: #{ann_model_forward.1} parent=0 // pred_fallthru
    _

</llo_original>
